<compile_context>
chip_gen: v6e
topology: v6e:2x2x1
jax: 0.10.0
libtpu: 0.0.40
codegen_flags: <defaults>
</compile_context>

<pallas_src>
import math

import jax
import jax.numpy as jnp
from jax import lax
from jax.experimental import pallas as pl
from jax.experimental.pallas import tpu as pltpu


def _round_up(x, m):
    return ((x + m - 1) // m) * m


# ----------------------------------------------------------------------------
# Kernel 1: per-batch x2 projection  ->  bf16 (L2p, Hp) = relu(x2 @ W.T) * v
# ----------------------------------------------------------------------------
def _x2_projection_kernel(x2_ref, w_ref, v_ref, out_ref):
    # x2_ref: (1, L2p, D) f32   w_ref: (Hp, D) bf16   v_ref: (1, Hp) f32
    # out_ref: (1, L2p, Hp) bf16
    x2 = x2_ref[0].astype(jnp.bfloat16)                        # (L2p, D)
    x2p = lax.dot_general(                                     # (L2p, Hp) f32
        x2, w_ref[...],
        dimension_numbers=(((1,), (1,)), ((), ())),            # NT, no .T
        preferred_element_type=jnp.float32)
    x2p = jnp.maximum(x2p, 0.0) * v_ref[...]                   # f32 elementwise
    out_ref[0] = x2p.astype(jnp.bfloat16)


# ----------------------------------------------------------------------------
# Kernel 2: per (batch, L1-tile) score block
# ----------------------------------------------------------------------------
def _score_kernel(x1_ref, x2rep_ref, w_ref, out_ref):
    # x1_ref: (1, TL1, D) f32   x2rep_ref: (1, L2p, Hp) bf16   w_ref: (Hp, D) bf16
    # out_ref: (1, TL1, L2p)
    x1 = x1_ref[0].astype(jnp.bfloat16)                        # (TL1, D)
    x1p = lax.dot_general(                                     # (TL1, Hp) f32
        x1, w_ref[...],
        dimension_numbers=(((1,), (1,)), ((), ())),
        preferred_element_type=jnp.float32)
    x1p = jnp.maximum(x1p, 0.0).astype(jnp.bfloat16)           # (TL1, Hp) bf16

    scores = lax.dot_general(                                  # (TL1, L2p) f32
        x1p, x2rep_ref[0],
        dimension_numbers=(((1,), (1,)), ((), ())),            # contract on Hp
        preferred_element_type=jnp.float32)
    out_ref[0] = scores.astype(out_ref.dtype)


# ----------------------------------------------------------------------------
# Wrapper
# ----------------------------------------------------------------------------
def attention_score(x1, x2, w, v, *, tl1=None, out_dtype=jnp.float32):
    """x1: (B,L1,D) f32, x2: (B,L2,D) f32, w: (H,D) f32 (Linear.weight),
       v: (1,1,H) f32 (linear_final)  ->  scores (B,L1,L2) out_dtype."""
    B, L1, D = x1.shape
    _, L2, _ = x2.shape
    H = w.shape[0]

    # Zero-pad H and L2 to lane-dense / MXU-friendly 128-multiples (exact).
    Hp = _round_up(H, 128)
    L2p = _round_up(L2, 128)

    w_b = jnp.pad(w, ((0, Hp - H), (0, 0))).astype(jnp.bfloat16)   # (Hp, D) bf16
    v_f = jnp.pad(v.reshape(1, H).astype(jnp.float32),
                  ((0, 0), (0, Hp - H)))                           # (1, Hp) f32
    x2_p = jnp.pad(x2, ((0, 0), (0, L2p - L2), (0, 0)))            # (B, L2p, D)

    out_itemsize = jnp.dtype(out_dtype).itemsize

    if tl1 is None:
        if L1 <= 512:
            tl1 = L1                                   # full-dim block, always legal
        else:
            # Fit (double-buffered) x1 tile + output tile + resident x2_rep/W
            # in a conservative 32 MiB budget (leaves headroom on v7x 64 MiB).
            budget = 32 * 1024 * 1024
            fixed = 2 * L2p * Hp * 2 + 2 * Hp * D * 2
            per_row = 2 * (D * 4 + L2p * out_itemsize)
            tl1 = max(128, min(512, ((budget - fixed) // per_row) // 128 * 128))
    n_l1 = pl.cdiv(L1, tl1)

    # --- Pass 1: precompute bf16 x2_rep (grid over batch only) ---------------
    proj_cost = pl.CostEstimate(
        flops=2 * B * L2p * Hp * D,
        transcendentals=0,
        bytes_accessed=B * L2p * D * 4 + Hp * D * 2 + Hp * 4 + B * L2p * Hp * 2)
    x2_rep = pl.pallas_call(
        _x2_projection_kernel,
        out_shape=jax.ShapeDtypeStruct((B, L2p, Hp), jnp.bfloat16),
        grid_spec=pltpu.PrefetchScalarGridSpec(
            num_scalar_prefetch=0,
            grid=(B,),
            in_specs=[
                pl.BlockSpec((1, L2p, D), lambda b: (b, 0, 0)),   # x2 (padded)
                pl.BlockSpec((Hp, D), lambda b: (0, 0)),          # W (bf16)
                pl.BlockSpec((1, Hp), lambda b: (0, 0)),          # v
            ],
            out_specs=pl.BlockSpec((1, L2p, Hp), lambda b: (b, 0, 0)),
        ),
        compiler_params=pltpu.CompilerParams(
            dimension_semantics=("parallel",),
            vmem_limit_bytes=40 * 1024 * 1024,
        ),
        cost_estimate=proj_cost,
    )(x2_p, w_b, v_f)

    # --- Pass 2: x1 projection + score matmul, both grid axes parallel -------
    score_cost = pl.CostEstimate(
        flops=2 * B * L1 * Hp * D + 2 * B * L1 * L2p * Hp,
        transcendentals=0,
        bytes_accessed=(B * L1 * D * 4 + B * L2p * Hp * 2 + Hp * D * 2
                        + B * L1 * L2p * out_itemsize))
    scores_p = pl.pallas_call(
        _score_kernel,
        out_shape=jax.ShapeDtypeStruct((B, L1, L2p), out_dtype),
        grid_spec=pltpu.PrefetchScalarGridSpec(
            num_scalar_prefetch=0,
            grid=(B, n_l1),
            in_specs=[
                pl.BlockSpec((1, tl1, D), lambda b, j: (b, j, 0)),    # x1 tile
                pl.BlockSpec((1, L2p, Hp), lambda b, j: (b, 0, 0)),   # x2_rep
                pl.BlockSpec((Hp, D), lambda b, j: (0, 0)),           # W (bf16)
            ],
            out_specs=pl.BlockSpec((1, tl1, L2p), lambda b, j: (b, j, 0)),
        ),
        compiler_params=pltpu.CompilerParams(
            dimension_semantics=("parallel", "parallel"),
            vmem_limit_bytes=40 * 1024 * 1024,
        ),
        cost_estimate=score_cost,
    )(x1, x2_rep, w_b)

    return scores_p[:, :, :L2]                       # drop L2 padding columns


def _reference(x1, x2, w, v):
    # Pure-JAX f32 reference mirroring AttentionScore.forward (eval mode).
    x1_rep = jax.nn.relu(jnp.einsum("bld,hd->blh", x1, w))
    x2_rep = jax.nn.relu(jnp.einsum("bld,hd->blh", x2, w)) * v   # v: (1,1,H)
    return jnp.einsum("bqh,bkh->bqk", x1_rep, x2_rep)


if __name__ == "__main__":
    # Small shapes: batch=2, len1=16, len2=8, input_size=32, attn_hidden=32.
    B, L1, L2, D, H = 2, 16, 8, 32, 32
    key = jax.random.PRNGKey(0)
    k1, k2, k3, k4 = jax.random.split(key, 4)

    x1 = jax.random.normal(k1, (B, L1, D), dtype=jnp.float32)
    x2 = jax.random.normal(k2, (B, L2, D), dtype=jnp.float32)

    # torch.nn.Linear-like uniform init for W; v is the trainable (1,1,H)
    # linear_final parameter (ones in torch; non-trivial here so the
    # v-scaling path is actually exercised).
    bound = 1.0 / math.sqrt(D)
    w = jax.random.uniform(k3, (H, D), minval=-bound, maxval=bound,
                           dtype=jnp.float32)
    v = jax.random.uniform(k4, (1, 1, H), minval=0.5, maxval=1.5,
                           dtype=jnp.float32)

    # tl1=8 so the L1-tile axis has 2 steps and the multi-tile (parallel x
    # parallel) grid path plus the L2/H padding + slicing are all exercised.
    scores = attention_score(x1, x2, w, v, tl1=8)
    scores = jax.block_until_ready(scores)

    ref = _reference(x1, x2, w, v)
    assert scores.shape == (B, L1, L2)
    # bf16 MXU operands with f32 accumulation -> relaxed tolerance vs f32 ref.
    assert jnp.allclose(scores, ref, atol=3e-2, rtol=3e-2), (
        "mismatch vs reference: max abs err %.4e"
        % float(jnp.max(jnp.abs(scores - ref))))

    print("KERNEL_OK")
</pallas_src>

<mosaic_0001>
module attributes {stable_mosaic.version = 11 : i64} {
  func.func @_x2_projection_kernel(%arg0: i32, %arg1: memref<1x128x32xf32, #tpu.memory_space<vmem>>, %arg2: memref<128x32xbf16, #tpu.memory_space<vmem>>, %arg3: memref<1x128xf32, #tpu.memory_space<vmem>>, %arg4: memref<1x128x128xbf16, #tpu.memory_space<vmem>>) attributes {dimension_semantics = [#tpu.dimension_semantics<parallel>], iteration_bounds = array<i64: 2>, scalar_prefetch = 0 : i64, scratch_operands = 0 : i64, tpu.core_type = #tpu.core_type<tc>, window_params = [{transform_indices = @transform_0, window_bounds = array<i64: 1, 128, 32>}, {pipeline_mode = #tpu.pipeline_mode<synchronous>, transform_indices = @transform_1, window_bounds = array<i64: 128, 32>}, {pipeline_mode = #tpu.pipeline_mode<synchronous>, transform_indices = @transform_2, window_bounds = array<i64: 1, 128>}, {transform_indices = @transform_3, window_bounds = array<i64: 1, 128, 128>}]} {
    %c0 = arith.constant 0 : index
    %c0_0 = arith.constant 0 : index
    %c0_1 = arith.constant 0 : index
    %0 = vector.load %arg1[%c0, %c0_0, %c0_1] : memref<1x128x32xf32, #tpu.memory_space<vmem>>, vector<1x128x32xf32>
    %1 = vector.shape_cast %0 : vector<1x128x32xf32> to vector<128x32xf32>
    %2 = arith.truncf %1 : vector<128x32xf32> to vector<128x32xbf16>
    %c0_2 = arith.constant 0 : index
    %c0_3 = arith.constant 0 : index
    %3 = vector.load %arg2[%c0_2, %c0_3] : memref<128x32xbf16, #tpu.memory_space<vmem>>, vector<128x32xbf16>
    %cst = arith.constant dense<0.000000e+00> : vector<128x128xf32>
    %4 = tpu.matmul %2, %3, %cst {dimension_numbers = #tpu.dot_dimension_numbers<[1], [1], [0], [0], [0, 0, 1, 0], [], []>} : vector<128x32xbf16>, vector<128x32xbf16>, vector<128x128xf32> -> vector<128x128xf32>
    %cst_4 = arith.constant 0.000000e+00 : f32
    %5 = vector.broadcast %cst_4 : f32 to vector<128x128xf32>
    %6 = arith.maximumf %4, %5 : vector<128x128xf32>
    %c0_5 = arith.constant 0 : index
    %c0_6 = arith.constant 0 : index
    %7 = vector.load %arg3[%c0_5, %c0_6] : memref<1x128xf32, #tpu.memory_space<vmem>>, vector<1x128xf32>
    %8 = vector.broadcast %7 : vector<1x128xf32> to vector<128x128xf32>
    %9 = arith.mulf %6, %8 : vector<128x128xf32>
    %10 = arith.truncf %9 : vector<128x128xf32> to vector<128x128xbf16>
    %c0_7 = arith.constant 0 : index
    %c0_8 = arith.constant 0 : index
    %c0_9 = arith.constant 0 : index
    %11 = vector.load %arg4[%c0_7, %c0_8, %c0_9] : memref<1x128x128xbf16, #tpu.memory_space<vmem>>, vector<1x128x128xbf16>
    %12 = vector.shape_cast %11 : vector<1x128x128xbf16> to vector<128x128xbf16>
    %13 = vector.shape_cast %10 : vector<128x128xbf16> to vector<1x128x128xbf16>
    tpu.vector_store %arg4[%c0_7, %c0_8, %c0_9], %13 {strides = array<i32>} : memref<1x128x128xbf16, #tpu.memory_space<vmem>>, vector<1x128x128xbf16>,
    return
  }
  func.func @transform_0(%arg0: i32) -> (i32, i32, i32) {
    %c0_i32 = arith.constant 0 : i32
    %c0_i32_0 = arith.constant 0 : i32
    %c0_i32_1 = arith.constant 0 : i32
    return %arg0, %c0_i32, %c0_i32_0 : i32, i32, i32
  }
  func.func @transform_1(%arg0: i32) -> (i32, i32) {
    %c0_i32 = arith.constant 0 : i32
    %c0_i32_0 = arith.constant 0 : i32
    %c0_i32_1 = arith.constant 0 : i32
    return %c0_i32, %c0_i32_0 : i32, i32
  }
  func.func @transform_2(%arg0: i32) -> (i32, i32) {
    %c0_i32 = arith.constant 0 : i32
    %c0_i32_0 = arith.constant 0 : i32
    %c0_i32_1 = arith.constant 0 : i32
    return %c0_i32, %c0_i32_0 : i32, i32
  }
  func.func @transform_3(%arg0: i32) -> (i32, i32, i32) {
    %c0_i32 = arith.constant 0 : i32
    %c0_i32_0 = arith.constant 0 : i32
    %c0_i32_1 = arith.constant 0 : i32
    return %arg0, %c0_i32, %c0_i32_0 : i32, i32, i32
  }
}

</mosaic_0001>

<llo_original>
// kernel: tpu_custom_call.1
$region0: #{tpu_custom_call.1}
  #allocation0 [shape = 'u32[]', space=smem, size = 0x4, offset = 0x4, fixed_abs, tag = 'smem constant byte address 0x4 - core index']
  #allocation1 [shape = 'u32[144,128]{1,0:T(1,128)}', space=vmem, size = 0x12000, scoped, tag = 'internal scratch']
  %s0 = inlined_call_operand.vmem [shape: f32[2,128,32], index: 0, kind: input, shape index: {}]
  %s1 = inlined_call_operand.vmem [shape: bf16[128,32], index: 1, kind: input, shape index: {}]
  %s2 = inlined_call_operand.vmem [shape: f32[1,128], index: 2, kind: input, shape index: {}]
  %s3 = inlined_call_operand.hbm [shape: bf16[2,128,128], index: 3, kind: output, shape index: {}]
  %s4 = sld [smem:[#allocation0]]
  $region45: #{tpu_custom_call.1} parent=0
    _
  %s6 = ssub.s32 1, %s4
  %s7 = scalar_select 0, %s6, %s4
  $region1: #{tpu_custom_call.1} parent=0
    #allocation2 [shape = 'u8[65536]{0}', space=vmem, size = 0x10000, scoped, tag = 'output window, operand 0']
    #allocation3 [shape = 's32[2]{0}', space=sflag, size = 0x8, scoped, tag = 'scoped memory for tpu_custom_call.1']
    %8 = vsyncpa [#allocation3], 0
    %s9 = scalar_lea.sflag [#allocation3], 1
    %10 = vsyncpa %s9, 0
    loop: start=0, step=1, limit=4
    $region2: #{tpu_custom_call.1} parent=1 // loop_pre_header
      _
    $region3: #{tpu_custom_call.1} parent=1 // loop_header
      %s12 = sphi 0, %s16
      %p13 = scmp.ge.s32.totalorder %s12, 4
      %s22 = sphi 0, %s24
      %s25 = sphi 0, %s22
      %s26 = sphi 0, %s25
      %s42 = sphi 0, %s26
      %s46 = sphi 0, %s46
      %s48 = sphi 0, %s46
      %s49 = sphi 0, %s48
      %s63 = sphi 0, %s49
      %s67 = sphi 0, %s67
      %s69 = sphi 0, %s67
      %s70 = sphi 0, %s69
      %s84 = sphi 0, %s70
      %s90 = sphi 0, %s92
      %s93 = sphi 0, %s90
      %s94 = sphi 0, %s93
      %s110 = sphi 0, %s94
    $region4: #{tpu_custom_call.1} parent=1 // loop_header_branch
      %15 = sbr.rel (%p13) target = $region8
    $region5: #{tpu_custom_call.1} parent=1 // loop_body
      %s17 = ssub.s32 %s12, 1
      %s18 = ssub.s32 %s12, 2
      %s19 = sadd.s32 %s12, 1
      %s20 = ssub.s32 %s12, %s19
      %p21 = scmp.eq.s32.totalorder %s20, 0
      %s23 = sadd.s32 %s22, 1
      %s24 = scalar_select %p21, %s22, %s23
      %p27 = pneg %p21
      %p28 = scmp.eq.s32.totalorder %s12, 1
      %p29 = por %p27, %p28
      %p30 = scmp.ne.s32.totalorder %s22, %s25
      %p31 = scmp.eq.s32.totalorder %s12, 0
      %p32 = por %p30, %p31
      %p33 = scmp.ne.s32.totalorder %s22, %s25
      %p34 = scmp.eq.s32.totalorder %s17, 1
      %p35 = por %p33, %p34
      %p36 = scmp.ne.s32.totalorder %s25, %s26
      %p37 = scmp.eq.s32.totalorder %s17, 0
      %p38 = por %p36, %p37
      %p39 = scmp.ne.s32.totalorder %s25, %s26
      %p40 = scmp.eq.s32.totalorder %s18, 1
      %p41 = por %p39, %p40
      %p43 = scmp.ne.s32.totalorder %s26, %s42
      %p44 = scmp.eq.s32.totalorder %s18, 0
      %p45 = por %p43, %p44
      %s47 = sadd.s32 %s46, 1
      %p50 = scmp.eq.s32.totalorder %s12, 1
      %p51 = scmp.ne.s32.totalorder %s46, %s48
      %p52 = scmp.eq.s32.totalorder %s12, 0
      %p53 = por %p51, %p52
      %p54 = scmp.ne.s32.totalorder %s46, %s48
      %p55 = scmp.eq.s32.totalorder %s17, 1
      %p56 = por %p54, %p55
      %p57 = scmp.ne.s32.totalorder %s48, %s49
      %p58 = scmp.eq.s32.totalorder %s17, 0
      %p59 = por %p57, %p58
      %p60 = scmp.ne.s32.totalorder %s48, %s49
      %p61 = scmp.eq.s32.totalorder %s18, 1
      %p62 = por %p60, %p61
      %p64 = scmp.ne.s32.totalorder %s49, %s63
      %p65 = scmp.eq.s32.totalorder %s18, 0
      %p66 = por %p64, %p65
      %s68 = sadd.s32 %s67, 1
      %p71 = scmp.eq.s32.totalorder %s12, 1
      %p72 = scmp.ne.s32.totalorder %s67, %s69
      %p73 = scmp.eq.s32.totalorder %s12, 0
      %p74 = por %p72, %p73
      %p75 = scmp.ne.s32.totalorder %s67, %s69
      %p76 = scmp.eq.s32.totalorder %s17, 1
      %p77 = por %p75, %p76
      %p78 = scmp.ne.s32.totalorder %s69, %s70
      %p79 = scmp.eq.s32.totalorder %s17, 0
      %p80 = por %p78, %p79
      %p81 = scmp.ne.s32.totalorder %s69, %s70
      %p82 = scmp.eq.s32.totalorder %s18, 1
      %p83 = por %p81, %p82
      %p85 = scmp.ne.s32.totalorder %s70, %s84
      %p86 = scmp.eq.s32.totalorder %s18, 0
      %p87 = por %p85, %p86
      %s88 = ssub.s32 %s12, %s19
      %p89 = scmp.eq.s32.totalorder %s88, 0
      %s91 = sadd.s32 %s90, 1
      %s92 = scalar_select %p89, %s90, %s91
      %p95 = pneg %p89
      %p96 = scmp.eq.s32.totalorder %s12, 1
      %p97 = por %p95, %p96
      %p98 = scmp.ne.s32.totalorder %s90, %s93
      %p99 = scmp.eq.s32.totalorder %s12, 0
      %p100 = por %p98, %p99
      %p101 = scmp.ne.s32.totalorder %s90, %s93
      %p102 = scmp.eq.s32.totalorder %s17, 1
      %p103 = por %p101, %p102
      %p104 = scmp.ne.s32.totalorder %s93, %s94
      %p105 = scmp.eq.s32.totalorder %s17, 0
      %p106 = por %p104, %p105
      %p107 = scmp.ne.s32.totalorder %s93, %s94
      %p108 = scmp.eq.s32.totalorder %s18, 1
      %p109 = por %p107, %p108
      %p111 = scmp.ne.s32.totalorder %s94, %s110
      %p112 = scmp.eq.s32.totalorder %s18, 0
      %p113 = por %p111, %p112
      %p114 = scmp.le.s32.totalorder 1, %s12
      %p115 = scmp.lt.s32.totalorder %s12, 3
      %p116 = pnand %p114, %p115
      %p117 = pneg %p116
      // Predicated region
      $region9: #{tpu_custom_call.1} parent=5 // pred_check
        _
      $region10: #{tpu_custom_call.1} parent=5 // pred_check_branch
        %119 = sbr.rel (%p116) target = $region12
      $region11: #{tpu_custom_call.1} parent=5 // pred_region
        %s120 = ssub.s32 %s12, 1
        // Predicated region
        $region13: #{tpu_custom_call.1} parent=11 // pred_check
          %p121 = pneg %p59
        $region14: #{tpu_custom_call.1} parent=11 // pred_check_branch
          %123 = sbr.rel (%p121) target = $region16
        $region15: #{tpu_custom_call.1} parent=11 // pred_region
          _
        $region16: #{tpu_custom_call.1} parent=11 // pred_fallthru
          _
        // Predicated region
        $region17: #{tpu_custom_call.1} parent=11 // pred_check
          %p124 = pneg %p80
        $region18: #{tpu_custom_call.1} parent=11 // pred_check_branch
          %126 = sbr.rel (%p124) target = $region20
        $region19: #{tpu_custom_call.1} parent=11 // pred_region
          _
        $region20: #{tpu_custom_call.1} parent=11 // pred_fallthru
          _
      $region12: #{tpu_custom_call.1} parent=5 // pred_fallthru
        _
      %p127 = scmp.lt.s32.totalorder %s12, 2
      // Predicated region
      $region21: #{tpu_custom_call.1} parent=5 // pred_check
        %p128 = pneg %p127
      $region22: #{tpu_custom_call.1} parent=5 // pred_check_branch
        %130 = sbr.rel (%p128) target = $region24
      $region23: #{tpu_custom_call.1} parent=5 // pred_region
        // Predicated region
        $region25: #{tpu_custom_call.1} parent=23 // pred_check
          %p131 = pneg %p32
        $region26: #{tpu_custom_call.1} parent=23 // pred_check_branch
          %133 = sbr.rel (%p131) target = $region28
        $region27: #{tpu_custom_call.1} parent=23 // pred_region
          %p134 = scmp.lt.s32.totalorder %s12, 1
          %s135 = scalar_select %p134, %s12, 1
          %s136 = smul.addr %s135, 16
          %s137 = smul.addr %s136, 8
          %s138 = scalar_lea.vmem %s0, %s137
        $region28: #{tpu_custom_call.1} parent=23 // pred_fallthru
          _
      $region24: #{tpu_custom_call.1} parent=5 // pred_fallthru
        _
      %p139 = scmp.le.s32.totalorder 1, %s12
      %p140 = scmp.lt.s32.totalorder %s12, 3
      %p141 = pnand %p139, %p140
      %p142 = pneg %p141
      // Predicated region
      $region29: #{tpu_custom_call.1} parent=5 // pred_check
        _
      $region30: #{tpu_custom_call.1} parent=5 // pred_check_branch
        %144 = sbr.rel (%p141) target = $region32
      $region31: #{tpu_custom_call.1} parent=5 // pred_region
        %s145 = ssub.s32 %s12, 1
        %p146 = scmp.lt.s32.totalorder %s17, 1
        %s147 = scalar_select %p146, %s17, 1
        %s148 = smul.addr %s147, 16
        %s149 = smul.addr %s148, 8
        %s150 = scalar_lea.vmem %s0, %s149
        %p151 = pneg %p38
        %p152 = pneg %p35
        %p153 = pneg %p59
        %p154 = pneg %p56
        %p155 = pneg %p80
        %p156 = pneg %p77
        %p157 = pneg %p106
        %p158 = pneg %p103
        %s159 = sand.u32 %s93, 1
        %s160 = scalar_lea.sflag [#allocation3], %s159
        %s161 = sand.u32 %s93, 1
        %s162 = smul.addr %s161, 64
        %s163 = scalar_lea.vmem [#allocation2], %s162
        %p164 = scmp.lt.s32.totalorder %s17, 1
        %s165 = scalar_select %p164, %s17, 1
        %s166 = smul.addr %s165, 16
        %s167 = smul.addr %s166, 8
        %s168 = scalar_lea.vmem %s0, %s167
        %v170 = vld [vmem:[%s168] sm:$0xff]
        %v171 = vld [vmem:[%s168 + $0x8] sm:$0xff]
        %v172 = vld [vmem:[%s168 + $0x10] sm:$0xff]
        %v173 = vld [vmem:[%s168 + $0x18] sm:$0xff]
        %v174 = vld [vmem:[%s168 + $0x20] sm:$0xff]
        %v175 = vld [vmem:[%s168 + $0x28] sm:$0xff]
        %v176 = vld [vmem:[%s168 + $0x30] sm:$0xff]
        %v177 = vld [vmem:[%s168 + $0x38] sm:$0xff]
        %v178 = vld [vmem:[%s168 + $0x40] sm:$0xff]
        %v179 = vld [vmem:[%s168 + $0x48] sm:$0xff]
        %v180 = vld [vmem:[%s168 + $0x50] sm:$0xff]
        %v181 = vld [vmem:[%s168 + $0x58] sm:$0xff]
        %v182 = vld [vmem:[%s168 + $0x60] sm:$0xff]
        %v183 = vld [vmem:[%s168 + $0x68] sm:$0xff]
        %v184 = vld [vmem:[%s168 + $0x70] sm:$0xff]
        %v185 = vld [vmem:[%s168 + $0x78] sm:$0xff]
        %v186 = vpack.c.bf16 %v171, %v170
        %v187 = vpack.c.bf16 %v173, %v172
        %v188 = vpack.c.bf16 %v175, %v174
        %v189 = vpack.c.bf16 %v177, %v176
        %v190 = vpack.c.bf16 %v179, %v178
        %v191 = vpack.c.bf16 %v181, %v180
        %v192 = vpack.c.bf16 %v183, %v182
        %v193 = vpack.c.bf16 %v185, %v184
        %v194 = vld [vmem:[%s1] sm:$0xf]
        %v195 = vld [vmem:[%s1 + $0x4] sm:$0xf]
        %v196 = vld [vmem:[%s1 + $0x8] sm:$0xf]
        %v197 = vld [vmem:[%s1 + $0xc] sm:$0xf]
        %v198 = vld [vmem:[%s1 + $0x10] sm:$0xf]
        %v199 = vld [vmem:[%s1 + $0x14] sm:$0xf]
        %v200 = vld [vmem:[%s1 + $0x18] sm:$0xf]
        %v201 = vld [vmem:[%s1 + $0x1c] sm:$0xf]
        %v202 = vld [vmem:[%s1 + $0x20] sm:$0xf]
        %v203 = vld [vmem:[%s1 + $0x24] sm:$0xf]
        %v204 = vld [vmem:[%s1 + $0x28] sm:$0xf]
        %v205 = vld [vmem:[%s1 + $0x2c] sm:$0xf]
        %v206 = vld [vmem:[%s1 + $0x30] sm:$0xf]
        %v207 = vld [vmem:[%s1 + $0x34] sm:$0xf]
        %v208 = vld [vmem:[%s1 + $0x38] sm:$0xf]
        %v209 = vld [vmem:[%s1 + $0x3c] sm:$0xf]
        %v226 = vunpack.c.l.b16 %v194
        %v227 = vunpack.c.l.b16 %v195
        %v228 = vunpack.c.l.b16 %v196
        %v229 = vunpack.c.l.b16 %v197
        %v230 = vunpack.c.l.b16 %v198
        %v231 = vunpack.c.l.b16 %v199
        %v232 = vunpack.c.l.b16 %v200
        %v233 = vunpack.c.l.b16 %v201
        %v234 = vunpack.c.l.b16 %v202
        %v235 = vunpack.c.l.b16 %v203
        %v236 = vunpack.c.l.b16 %v204
        %v237 = vunpack.c.l.b16 %v205
        %v238 = vunpack.c.l.b16 %v206
        %v239 = vunpack.c.l.b16 %v207
        %v240 = vunpack.c.l.b16 %v208
        %v241 = vunpack.c.l.b16 %v209
        %v242 = vpack.c.b16 %v227, %v226
        %v243 = vpack.c.b16 %v229, %v228
        %v244 = vpack.c.b16 %v231, %v230
        %v245 = vpack.c.b16 %v233, %v232
        %v246 = vpack.c.b16 %v235, %v234
        %v247 = vpack.c.b16 %v237, %v236
        %v248 = vpack.c.b16 %v239, %v238
        %v249 = vpack.c.b16 %v241, %v240
        %vm250 = vcmask 261120
        %v252 = vsel %vm250, %v186, 0
        %v255 = vsel %vm250, %v187, 0
        %v258 = vsel %vm250, %v188, 0
        %v261 = vsel %vm250, %v189, 0
        %v264 = vsel %vm250, %v190, 0
        %v267 = vsel %vm250, %v191, 0
        %v270 = vsel %vm250, %v192, 0
        %v273 = vsel %vm250, %v193, 0
        %v276 = vsel %vm250, %v242, 0
        %v279 = vsel %vm250, %v243, 0
        %v282 = vsel %vm250, %v244, 0
        %v285 = vsel %vm250, %v245, 0
        %v288 = vsel %vm250, %v246, 0
        %v291 = vsel %vm250, %v247, 0
        %v294 = vsel %vm250, %v248, 0
        %v297 = vsel %vm250, %v249, 0
        %299 = vmatprep.subr.bf16.mxu0 0
        %300 = vmatpush1.bf16.xpose.msra.mxu0 %v297
        %301 = vmatprep.subr.bf16.mxu0 0
        %302 = vmatpush1.bf16.xpose.msra.mxu0 %v294
        %303 = vmatprep.subr.bf16.mxu0 0
        %304 = vmatpush1.bf16.xpose.msra.mxu0 %v291
        %305 = vmatprep.subr.bf16.mxu0 0
        %306 = vmatpush1.bf16.xpose.msra.mxu0 %v288
        %307 = vmatprep.subr.bf16.mxu0 0
        %308 = vmatpush1.bf16.xpose.msra.mxu0 %v285
        %309 = vmatprep.subr.bf16.mxu0 0
        %310 = vmatpush1.bf16.xpose.msra.mxu0 %v282
        %311 = vmatprep.subr.bf16.mxu0 0
        %312 = vmatpush1.bf16.xpose.msra.mxu0 %v279
        %313 = vmatprep.subr.bf16.mxu0 0
        %314 = vmatpush1.bf16.xpose.msra.mxu0 %v276
        %315 = vmatprep.subr.bf16.mxu0 0
        %316 = vmatpush2.bf16.xpose.msra.mxu0 0
        %317 = vmatprep.subr.bf16.mxu0 0
        %318 = vmatpush2.bf16.xpose.msra.mxu0 0
        %319 = vmatprep.subr.bf16.mxu0 0
        %320 = vmatpush2.bf16.xpose.msra.mxu0 0
        %321 = vmatprep.subr.bf16.mxu0 0
        %322 = vmatpush2.bf16.xpose.msra.mxu0 0
        %323 = vmatprep.subr.bf16.mxu0 0
        %324 = vmatpush2.bf16.xpose.msra.mxu0 0
        %325 = vmatprep.subr.bf16.mxu0 0
        %326 = vmatpush2.bf16.xpose.msra.mxu0 0
        %327 = vmatprep.subr.bf16.mxu0 0
        %328 = vmatpush2.bf16.xpose.msra.mxu0 0
        %329 = vmatprep.subr.bf16.mxu0 0
        %330 = vmatpush2.bf16.xpose.msra.mxu0 0
        %331 = vmatprep.mubr.bf16.mxu0 0
        %332 = vmatmul.mubr.bf16.gmra.mxu0 %v252
        %v333 = vpop.f32.mrf.mxu0
        %v334 = vadd.f32 0.0, %v333
        %v335 = vpop.f32.mrf.mxu0
        %v336 = vpop.f32.mrf.mxu0
        %v337 = vadd.f32 0.0, %v336
        %v338 = vpop.f32.mrf.mxu0
        %339 = vmatprep.mubr.bf16.mxu0 0
        %340 = vmatmul.mubr.bf16.gmra.mxu0 %v255
        %v341 = vpop.f32.mrf.mxu0
        %v342 = vadd.f32 0.0, %v341
        %v343 = vpop.f32.mrf.mxu0
        %v344 = vpop.f32.mrf.mxu0
        %v345 = vadd.f32 0.0, %v344
        %v346 = vpop.f32.mrf.mxu0
        %347 = vmatprep.mubr.bf16.mxu0 0
        %348 = vmatmul.mubr.bf16.gmra.mxu0 %v258
        %v349 = vpop.f32.mrf.mxu0
        %v350 = vadd.f32 0.0, %v349
        %v351 = vpop.f32.mrf.mxu0
        %v352 = vpop.f32.mrf.mxu0
        %v353 = vadd.f32 0.0, %v352
        %v354 = vpop.f32.mrf.mxu0
        %355 = vmatprep.mubr.bf16.mxu0 0
        %356 = vmatmul.mubr.bf16.gmra.mxu0 %v261
        %v357 = vpop.f32.mrf.mxu0
        %v358 = vadd.f32 0.0, %v357
        %v359 = vpop.f32.mrf.mxu0
        %v360 = vpop.f32.mrf.mxu0
        %v361 = vadd.f32 0.0, %v360
        %v362 = vpop.f32.mrf.mxu0
        %363 = vmatprep.mubr.bf16.mxu0 0
        %364 = vmatmul.mubr.bf16.gmra.mxu0 %v264
        %v365 = vpop.f32.mrf.mxu0
        %v366 = vadd.f32 0.0, %v365
        %v367 = vpop.f32.mrf.mxu0
        %v368 = vpop.f32.mrf.mxu0
        %v369 = vadd.f32 0.0, %v368
        %v370 = vpop.f32.mrf.mxu0
        %371 = vmatprep.mubr.bf16.mxu0 0
        %372 = vmatmul.mubr.bf16.gmra.mxu0 %v267
        %v373 = vpop.f32.mrf.mxu0
        %v374 = vadd.f32 0.0, %v373
        %v375 = vpop.f32.mrf.mxu0
        %v376 = vpop.f32.mrf.mxu0
        %v377 = vadd.f32 0.0, %v376
        %v378 = vpop.f32.mrf.mxu0
        %379 = vmatprep.mubr.bf16.mxu0 0
        %380 = vmatmul.mubr.bf16.gmra.mxu0 %v270
        %v381 = vpop.f32.mrf.mxu0
        %v382 = vadd.f32 0.0, %v381
        %v383 = vpop.f32.mrf.mxu0
        %v384 = vpop.f32.mrf.mxu0
        %v385 = vadd.f32 0.0, %v384
        %v386 = vpop.f32.mrf.mxu0
        %387 = vmatprep.mubr.bf16.mxu0 0
        %388 = vmatmul.mubr.bf16.gmra.mxu0 %v273
        %v389 = vpop.f32.mrf.mxu0
        %v390 = vadd.f32 0.0, %v389
        %v391 = vpop.f32.mrf.mxu0
        %v392 = vpop.f32.mrf.mxu0
        %v393 = vadd.f32 0.0, %v392
        %v394 = vpop.f32.mrf.mxu0
        %395 = vdwg.mxu0
        %v396 = vmax.f32 %v334, 0.0
        %v397 = vmax.f32 %v337, 0.0
        %v398 = vmax.f32 %v342, 0.0
        %v399 = vmax.f32 %v345, 0.0
        %v400 = vmax.f32 %v350, 0.0
        %v401 = vmax.f32 %v353, 0.0
        %v402 = vmax.f32 %v358, 0.0
        %v403 = vmax.f32 %v361, 0.0
        %v404 = vmax.f32 %v366, 0.0
        %v405 = vmax.f32 %v369, 0.0
        %v406 = vmax.f32 %v374, 0.0
        %v407 = vmax.f32 %v377, 0.0
        %v408 = vmax.f32 %v382, 0.0
        %v409 = vmax.f32 %v385, 0.0
        %v410 = vmax.f32 %v390, 0.0
        %v411 = vmax.f32 %v393, 0.0
        %v412 = vld [vmem:[%s2] sm:$0x1]
        %v414 = vlaneseq
        %v415 = vshrl.u32 %v414, 7
        %v416 = vsub.s32 0, %v415
        %v417 = vrot.slane %v412, %v416
        %v419 = vmul.f32 %v396, %v417
        %v420 = vmul.f32 %v397, %v417
        %v421 = vmul.f32 %v398, %v417
        %v422 = vmul.f32 %v399, %v417
        %v423 = vmul.f32 %v400, %v417
        %v424 = vmul.f32 %v401, %v417
        %v425 = vmul.f32 %v402, %v417
        %v426 = vmul.f32 %v403, %v417
        %v427 = vmul.f32 %v404, %v417
        %v428 = vmul.f32 %v405, %v417
        %v429 = vmul.f32 %v406, %v417
        %v430 = vmul.f32 %v407, %v417
        %v431 = vmul.f32 %v408, %v417
        %v432 = vmul.f32 %v409, %v417
        %v433 = vmul.f32 %v410, %v417
        %v434 = vmul.f32 %v411, %v417
        %v435 = vpack.c.bf16 %v420, %v419
        %v436 = vpack.c.bf16 %v422, %v421
        %v437 = vpack.c.bf16 %v424, %v423
        %v438 = vpack.c.bf16 %v426, %v425
        %v439 = vpack.c.bf16 %v428, %v427
        %v440 = vpack.c.bf16 %v430, %v429
        %v441 = vpack.c.bf16 %v432, %v431
        %v442 = vpack.c.bf16 %v434, %v433
        %v451 = vunpack.c.l.b16 %v435
        %v452 = vunpack.c.h.b16 %v435
        %v453 = vunpack.c.l.b16 %v436
        %v454 = vunpack.c.h.b16 %v436
        %v455 = vunpack.c.l.b16 %v437
        %v456 = vunpack.c.h.b16 %v437
        %v457 = vunpack.c.l.b16 %v438
        %v458 = vunpack.c.h.b16 %v438
        %v459 = vunpack.c.l.b16 %v439
        %v460 = vunpack.c.h.b16 %v439
        %v461 = vunpack.c.l.b16 %v440
        %v462 = vunpack.c.h.b16 %v440
        %v463 = vunpack.c.l.b16 %v441
        %v464 = vunpack.c.h.b16 %v441
        %v465 = vunpack.c.l.b16 %v442
        %v466 = vunpack.c.h.b16 %v442
        %v467 = vpack.c.b16 %v451, %v451
        %v468 = vpack.c.b16 %v452, %v452
        %v469 = vpack.c.b16 %v453, %v453
        %v470 = vpack.c.b16 %v454, %v454
        %v471 = vpack.c.b16 %v455, %v455
        %v472 = vpack.c.b16 %v456, %v456
        %v473 = vpack.c.b16 %v457, %v457
        %v474 = vpack.c.b16 %v458, %v458
        %v475 = vpack.c.b16 %v459, %v459
        %v476 = vpack.c.b16 %v460, %v460
        %v477 = vpack.c.b16 %v461, %v461
        %v478 = vpack.c.b16 %v462, %v462
        %v479 = vpack.c.b16 %v463, %v463
        %v480 = vpack.c.b16 %v464, %v464
        %v481 = vpack.c.b16 %v465, %v465
        %v482 = vpack.c.b16 %v466, %v466
        %499 = vst [vmem:[%s163] sm:$0xf] %v467
        %500 = vst [vmem:[%s163 + $0x4] sm:$0xf] %v468
        %501 = vst [vmem:[%s163 + $0x8] sm:$0xf] %v469
        %502 = vst [vmem:[%s163 + $0xc] sm:$0xf] %v470
        %503 = vst [vmem:[%s163 + $0x10] sm:$0xf] %v471
        %504 = vst [vmem:[%s163 + $0x14] sm:$0xf] %v472
        %505 = vst [vmem:[%s163 + $0x18] sm:$0xf] %v473
        %506 = vst [vmem:[%s163 + $0x1c] sm:$0xf] %v474
        %507 = vst [vmem:[%s163 + $0x20] sm:$0xf] %v475
        %508 = vst [vmem:[%s163 + $0x24] sm:$0xf] %v476
        %509 = vst [vmem:[%s163 + $0x28] sm:$0xf] %v477
        %510 = vst [vmem:[%s163 + $0x2c] sm:$0xf] %v478
        %511 = vst [vmem:[%s163 + $0x30] sm:$0xf] %v479
        %512 = vst [vmem:[%s163 + $0x34] sm:$0xf] %v480
        %513 = vst [vmem:[%s163 + $0x38] sm:$0xf] %v481
        %514 = vst [vmem:[%s163 + $0x3c] sm:$0xf] %v482
        %s515 = sand.u32 %s93, 1
        %s516 = scalar_lea.sflag [#allocation3], %s515
        %s517 = sand.u32 %s93, 1
        %s518 = smul.addr %s517, 64
        %s519 = scalar_lea.vmem [#allocation2], %s518
        // Predicated region
        $region33: #{tpu_custom_call.1} parent=31 // pred_check
          %p520 = pneg %p103
        $region34: #{tpu_custom_call.1} parent=31 // pred_check_branch
          %522 = sbr.rel (%p520) target = $region36
        $region35: #{tpu_custom_call.1} parent=31 // pred_region
          %s524 = ssub.s32 1024, 1024
          %525 = vsyncadd %s516, %s524
          %s526 = smul.addr %s17, 16
          %s527 = smul.addr %s526, 64
          %s528 = scalar_lea.hbm %s3, %s527
          %s529 = sshll.u32 %s519, 4
          %s530 = int_to_ptr.vmem [resolvable:$true] %s529
          %535 = dma.vmem_to_hbm [thread:$0]  %s530, 1024, %s528, %s516, 64, 64, 4
        $region36: #{tpu_custom_call.1} parent=31 // pred_fallthru
          _
      $region32: #{tpu_custom_call.1} parent=5 // pred_fallthru
        _
      %p536 = scmp.le.s32.totalorder 2, %s12
      // Predicated region
      $region37: #{tpu_custom_call.1} parent=5 // pred_check
        %p537 = pneg %p536
      $region38: #{tpu_custom_call.1} parent=5 // pred_check_branch
        %539 = sbr.rel (%p537) target = $region40
      $region39: #{tpu_custom_call.1} parent=5 // pred_region
        %s540 = ssub.s32 %s12, 2
        // Predicated region
        $region41: #{tpu_custom_call.1} parent=39 // pred_check
          %p541 = pneg %p109
        $region42: #{tpu_custom_call.1} parent=39 // pred_check_branch
          %543 = sbr.rel (%p541) target = $region44
        $region43: #{tpu_custom_call.1} parent=39 // pred_region
          %s544 = sand.u32 %s94, 1
          %s545 = scalar_lea.sflag [#allocation3], %s544
          %s546 = sand.u32 %s94, 1
          %s547 = smul.addr %s546, 64
          %s548 = scalar_lea.vmem [#allocation2], %s547
          %549 = dma.done %s545, 1024
        $region44: #{tpu_custom_call.1} parent=39 // pred_fallthru
          _
      $region40: #{tpu_custom_call.1} parent=5 // pred_fallthru
        _
    $region6: #{tpu_custom_call.1} parent=1 // loop_footer
      %s16 = sadd.s32 1, %s12
    $region7: #{tpu_custom_call.1} parent=1 // loop_footer_branch
      %11 = sbr.rel target = $region3
    $region8: #{tpu_custom_call.1} parent=1 // loop_exit
      _
    %550 = vsyncpa [#allocation3], 1
    %s551 = scalar_lea.sflag [#allocation3], 1
    %552 = vsyncpa %s551, 1

</llo_original>
